<compile_context>
chip_gen: v6e
topology: v6e:2x2x1
jax: 0.10.0
libtpu: 0.0.40
codegen_flags: <defaults>
</compile_context>

<pallas_src>
import jax
import jax.numpy as jnp
from jax.experimental import pallas as pl
from jax.experimental.pallas import tpu as pltpu

EPS = 1e-5


def make_resblock_kernel(N, H, W, C):
    """Fused ResBlock kernel on the lane-dense (H, N*W*C) layout."""
    NWC = N * W * C
    inv_cnt = 1.0 / float(N * H * W)   # per-channel element count for BN stats

    def kernel(x_ref, b1_ref, b2_ref, tt_ref,
               g1_ref, bt1_ref, g2_ref, bt2_ref, out_ref):
        x = x_ref[...]                  # (H, NWC); lane = n*W*C + w*C + c
        tt = tt_ref[...]                # (NWC, NWC) channel-pooling matrix
        zero_row = jnp.zeros((1, NWC), jnp.float32)

        def conv3x3(h, bstack):
            # 3 H-shifted views (zero halo rows at the H boundary), K-stacked
            # along lanes -> one MXU matmul with K = 3*NWC.  W-boundary zeros,
            # batch block-diagonality and channel mixing are baked into bstack.
            up = jnp.concatenate([zero_row, h[:H - 1, :]], axis=0)   # row r-1
            dn = jnp.concatenate([h[1:, :], zero_row], axis=0)       # row r+1
            x3 = jnp.concatenate([up, h, dn], axis=1)                # (H, 3*NWC)
            return jnp.dot(x3, bstack, preferred_element_type=jnp.float32)

        def batchnorm(acc, g, bt):
            # One-pass batch stats: reduce rows on the XLU first, then a single
            # tiny (2, NWC) @ (NWC, NWC) pooling matmul for sum and sum-of-sq.
            s = jnp.sum(acc, axis=0, keepdims=True)                  # (1, NWC)
            s2 = jnp.sum(acc * acc, axis=0, keepdims=True)           # (1, NWC)
            pooled = jnp.dot(jnp.concatenate([s, s2], axis=0), tt,
                             preferred_element_type=jnp.float32)     # (2, NWC)
            mean = pooled[0:1, :] * inv_cnt
            var = pooled[1:2, :] * inv_cnt - mean * mean             # biased var
            return (acc - mean) * (jax.lax.rsqrt(var + EPS) * g) + bt

        # Stage 1: conv1 -> BN1 -> ReLU (conv bias cancelled by BN mean-sub).
        h1 = jnp.maximum(
            batchnorm(conv3x3(x, b1_ref[...]), g1_ref[...], bt1_ref[...]), 0.0)
        # Stage 2: conv2 -> BN2 -> +identity -> ReLU.
        y = batchnorm(conv3x3(h1, b2_ref[...]), g2_ref[...], bt2_ref[...])
        out_ref[...] = jnp.maximum(y + x, 0.0).astype(out_ref.dtype)

    return kernel


def build_banded_stacked(w_hwio, N, W):
    """(3,3,Cin,Cout) HWIO weight -> (3*N*W*C, N*W*C) K-stacked banded matrix.

    For the ky-th H-shifted view (input row r+ky-1), input lane n*W*C+wi*C+ci
    maps to output lane n*W*C+wo*C+co with weight w[ky, wi-wo+1, ci, co] when
    |wi-wo| <= 1 (SAME padding in W) and the batch blocks match, else 0.
    """
    C = w_hwio.shape[-1]
    WC = W * C
    wi = jnp.arange(W)[:, None]
    wo = jnp.arange(W)[None, :]
    kx = wi - wo + 1                                        # (W, W)
    valid = (kx >= 0) & (kx <= 2)
    blocks = w_hwio[:, jnp.clip(kx, 0, 2), :, :]            # (3, W, W, Cin, Cout)
    blocks = jnp.where(valid[None, :, :, None, None], blocks, 0.0)
    # [ky, wi, wo, ci, co] -> [ky, wi, ci, wo, co] -> (3, W*C, W*C)
    band = jnp.transpose(blocks, (0, 1, 3, 2, 4)).reshape(3, WC, WC)
    # Block-diagonal over the lane-folded batch, then K-stack the 3 ky taps.
    band_n = jnp.einsum("nm,kij->knimj", jnp.eye(N, dtype=jnp.float32), band)
    return band_n.reshape(3 * N * WC, N * WC)


def precompute_operands(params, N, W, C):
    """Per-weight constants, hoisted out of the per-forward path (review item)."""
    nw = N * W
    NWC = nw * C

    def tile_c(v):   # per-channel vector -> (1, NWC) lane pattern [c0..cC-1]*N*W
        return jnp.tile(v.astype(jnp.float32), nw).reshape(1, NWC)

    return {
        "b1": build_banded_stacked(params["w1_hwio"], N, W),
        "b2": build_banded_stacked(params["w2_hwio"], N, W),
        # TT[i, j] = (i mod C == j mod C): row-sum per channel, re-tiled across
        # every lane group in one matmul.
        "tt": jnp.tile(jnp.eye(C, dtype=jnp.float32), (nw, nw)),
        "g1": tile_c(params["g1"]), "bt1": tile_c(params["bt1"]),
        "g2": tile_c(params["g2"]), "bt2": tile_c(params["bt2"]),
    }


def resblock_pallas(x_nchw, prep):
    """ResBlock forward.  x_nchw: (N, C, H, W) float32."""
    N, C, H, W = x_nchw.shape
    NWC = N * W * C
    # NCHW -> (H, N, W, C) -> lane-dense (H, N*W*C): 128 lanes at these shapes.
    x_flat = jnp.transpose(x_nchw, (2, 0, 3, 1)).reshape(H, NWC)

    kernel = make_resblock_kernel(N, H, W, C)
    vmem = lambda: pl.BlockSpec(memory_space=pltpu.MemorySpace.VMEM)

    out_flat = pl.pallas_call(
        kernel,
        out_shape=jax.ShapeDtypeStruct((H, NWC), x_nchw.dtype),
        in_specs=[vmem() for _ in range(8)],
        out_specs=vmem(),
    )(x_flat, prep["b1"], prep["b2"], prep["tt"],
      prep["g1"], prep["bt1"], prep["g2"], prep["bt2"])

    # (H, N, W, C) -> NCHW
    return jnp.transpose(out_flat.reshape(H, N, W, C), (1, 3, 0, 2))


def resblock_reference(x_nchw, params):
    """Plain-JAX reference (matches PyTorch training-mode forward, incl. bias)."""

    def conv(x, w_oihw, b):
        y = jax.lax.conv_general_dilated(
            x, w_oihw, window_strides=(1, 1), padding="SAME",
            dimension_numbers=("NCHW", "OIHW", "NCHW"),
        )
        return y + b[None, :, None, None]

    def bn(x, g, bt):
        mean = jnp.mean(x, axis=(0, 2, 3), keepdims=True)
        var = jnp.mean(jnp.square(x - mean), axis=(0, 2, 3), keepdims=True)
        xhat = (x - mean) * jax.lax.rsqrt(var + EPS)
        return xhat * g[None, :, None, None] + bt[None, :, None, None]

    out = jax.nn.relu(bn(conv(x_nchw, params["w1_oihw"], params["b1"]),
                         params["g1"], params["bt1"]))
    out = bn(conv(out, params["w2_oihw"], params["b2"]),
             params["g2"], params["bt2"])
    return jax.nn.relu(out + x_nchw)


def init_params(key, channels):
    ks = jax.random.split(key, 8)
    C = channels
    w1 = 0.1 * jax.random.normal(ks[0], (C, C, 3, 3), jnp.float32)  # OIHW
    w2 = 0.1 * jax.random.normal(ks[1], (C, C, 3, 3), jnp.float32)
    return {
        "w1_oihw": w1,
        "w2_oihw": w2,
        # HWIO: w[ky, kx] is (C_in, C_out).
        "w1_hwio": jnp.transpose(w1, (2, 3, 1, 0)),
        "w2_hwio": jnp.transpose(w2, (2, 3, 1, 0)),
        "b1": 0.05 * jax.random.normal(ks[2], (C,), jnp.float32),
        "b2": 0.05 * jax.random.normal(ks[3], (C,), jnp.float32),
        "g1": 1.0 + 0.1 * jax.random.normal(ks[4], (C,), jnp.float32),
        "g2": 1.0 + 0.1 * jax.random.normal(ks[5], (C,), jnp.float32),
        "bt1": 0.05 * jax.random.normal(ks[6], (C,), jnp.float32),
        "bt2": 0.05 * jax.random.normal(ks[7], (C,), jnp.float32),
    }


if __name__ == "__main__":
    key = jax.random.PRNGKey(0)
    k_x, k_p = jax.random.split(key)

    N, C, H, W = 2, 4, 16, 16
    x = jax.random.normal(k_x, (N, C, H, W), jnp.float32)
    params = init_params(k_p, C)

    # Hoisted per-weight constants: built once (per weight update), not per call.
    prep = precompute_operands(params, N, W, C)

    fwd = jax.jit(resblock_pallas)
    out = jax.block_until_ready(fwd(x, prep))

    ref = resblock_reference(x, params)
    max_err = float(jnp.max(jnp.abs(out - ref)))
    assert out.shape == (N, C, H, W), out.shape
    assert max_err < 1e-3, f"mismatch vs reference: {max_err}"

    print("KERNEL_OK")
</pallas_src>

<mosaic_0001>
module attributes {stable_mosaic.version = 11 : i64} {
  func.func @kernel(%arg0: memref<16x128xf32, #tpu.memory_space<vmem>>, %arg1: memref<384x128xf32, #tpu.memory_space<vmem>>, %arg2: memref<384x128xf32, #tpu.memory_space<vmem>>, %arg3: memref<128x128xf32, #tpu.memory_space<vmem>>, %arg4: memref<1x128xf32, #tpu.memory_space<vmem>>, %arg5: memref<1x128xf32, #tpu.memory_space<vmem>>, %arg6: memref<1x128xf32, #tpu.memory_space<vmem>>, %arg7: memref<1x128xf32, #tpu.memory_space<vmem>>, %arg8: memref<16x128xf32, #tpu.memory_space<vmem>>) attributes {dimension_semantics = [], scalar_prefetch = 0 : i64, scratch_operands = 0 : i64, tpu.core_type = #tpu.core_type<tc>} {
    %c0 = arith.constant 0 : index
    %c0_0 = arith.constant 0 : index
    %0 = vector.load %arg0[%c0, %c0_0] : memref<16x128xf32, #tpu.memory_space<vmem>>, vector<16x128xf32>
    %c0_1 = arith.constant 0 : index
    %c0_2 = arith.constant 0 : index
    %1 = vector.load %arg3[%c0_1, %c0_2] : memref<128x128xf32, #tpu.memory_space<vmem>>, vector<128x128xf32>
    %cst = arith.constant 0.000000e+00 : f32
    %2 = vector.broadcast %cst : f32 to vector<1x128xf32>
    %c0_3 = arith.constant 0 : index
    %c0_4 = arith.constant 0 : index
    %3 = vector.load %arg1[%c0_3, %c0_4] : memref<384x128xf32, #tpu.memory_space<vmem>>, vector<384x128xf32>
    %4 = vector.extract_strided_slice %0 {offsets = [0, 0], sizes = [15, 128], strides = [1, 1]} : vector<16x128xf32> to vector<15x128xf32>
    %5 = tpu.concatenate %2, %4 in 0 : vector<1x128xf32>, vector<15x128xf32> -> vector<16x128xf32>
    %6 = vector.extract_strided_slice %0 {offsets = [1, 0], sizes = [15, 128], strides = [1, 1]} : vector<16x128xf32> to vector<15x128xf32>
    %7 = tpu.concatenate %6, %2 in 0 : vector<15x128xf32>, vector<1x128xf32> -> vector<16x128xf32>
    %8 = tpu.concatenate %5, %0, %7 in 1 : vector<16x128xf32>, vector<16x128xf32>, vector<16x128xf32> -> vector<16x384xf32>
    %cst_5 = arith.constant dense<0.000000e+00> : vector<16x128xf32>
    %9 = tpu.matmul %8, %3, %cst_5 {dimension_numbers = #tpu.dot_dimension_numbers<[1], [0], [0], [1], [0, 0, 1, 1], [], []>} : vector<16x384xf32>, vector<384x128xf32>, vector<16x128xf32> -> vector<16x128xf32>
    %c0_6 = arith.constant 0 : index
    %c0_7 = arith.constant 0 : index
    %10 = vector.load %arg4[%c0_6, %c0_7] : memref<1x128xf32, #tpu.memory_space<vmem>>, vector<1x128xf32>
    %c0_8 = arith.constant 0 : index
    %c0_9 = arith.constant 0 : index
    %11 = vector.load %arg5[%c0_8, %c0_9] : memref<1x128xf32, #tpu.memory_space<vmem>>, vector<1x128xf32>
    %cst_10 = arith.constant dense<0.000000e+00> : vector<128xf32>
    %12 = vector.multi_reduction <add>, %9, %cst_10 [0] : vector<16x128xf32> to vector<128xf32>
    %13 = vector.shape_cast %12 : vector<128xf32> to vector<1x128xf32>
    %14 = arith.mulf %9, %9 : vector<16x128xf32>
    %cst_11 = arith.constant dense<0.000000e+00> : vector<128xf32>
    %15 = vector.multi_reduction <add>, %14, %cst_11 [0] : vector<16x128xf32> to vector<128xf32>
    %16 = vector.shape_cast %15 : vector<128xf32> to vector<1x128xf32>
    %17 = tpu.concatenate %13, %16 in 0 : vector<1x128xf32>, vector<1x128xf32> -> vector<2x128xf32>
    %cst_12 = arith.constant dense<0.000000e+00> : vector<2x128xf32>
    %18 = tpu.matmul %17, %1, %cst_12 {dimension_numbers = #tpu.dot_dimension_numbers<[1], [0], [0], [1], [0, 0, 1, 1], [], []>} : vector<2x128xf32>, vector<128x128xf32>, vector<2x128xf32> -> vector<2x128xf32>
    %19 = vector.extract_strided_slice %18 {offsets = [0, 0], sizes = [1, 128], strides = [1, 1]} : vector<2x128xf32> to vector<1x128xf32>
    %cst_13 = arith.constant 0.001953125 : f32
    %20 = vector.broadcast %cst_13 : f32 to vector<1x128xf32>
    %21 = arith.mulf %19, %20 : vector<1x128xf32>
    %22 = vector.extract_strided_slice %18 {offsets = [1, 0], sizes = [1, 128], strides = [1, 1]} : vector<2x128xf32> to vector<1x128xf32>
    %cst_14 = arith.constant 0.001953125 : f32
    %23 = vector.broadcast %cst_14 : f32 to vector<1x128xf32>
    %24 = arith.mulf %22, %23 : vector<1x128xf32>
    %25 = arith.mulf %21, %21 : vector<1x128xf32>
    %26 = arith.subf %24, %25 : vector<1x128xf32>
    %27 = vector.broadcast %21 : vector<1x128xf32> to vector<16x128xf32>
    %28 = arith.subf %9, %27 : vector<16x128xf32>
    %cst_15 = arith.constant 9.99999974E-6 : f32
    %29 = vector.broadcast %cst_15 : f32 to vector<1x128xf32>
    %30 = arith.addf %26, %29 : vector<1x128xf32>
    %31 = math.rsqrt %30 : vector<1x128xf32>
    %32 = arith.mulf %31, %10 : vector<1x128xf32>
    %33 = vector.broadcast %32 : vector<1x128xf32> to vector<16x128xf32>
    %34 = arith.mulf %28, %33 : vector<16x128xf32>
    %35 = vector.broadcast %11 : vector<1x128xf32> to vector<16x128xf32>
    %36 = arith.addf %34, %35 : vector<16x128xf32>
    %cst_16 = arith.constant 0.000000e+00 : f32
    %37 = vector.broadcast %cst_16 : f32 to vector<16x128xf32>
    %38 = arith.maximumf %36, %37 : vector<16x128xf32>
    %c0_17 = arith.constant 0 : index
    %c0_18 = arith.constant 0 : index
    %39 = vector.load %arg2[%c0_17, %c0_18] : memref<384x128xf32, #tpu.memory_space<vmem>>, vector<384x128xf32>
    %40 = vector.extract_strided_slice %38 {offsets = [0, 0], sizes = [15, 128], strides = [1, 1]} : vector<16x128xf32> to vector<15x128xf32>
    %41 = tpu.concatenate %2, %40 in 0 : vector<1x128xf32>, vector<15x128xf32> -> vector<16x128xf32>
    %42 = vector.extract_strided_slice %38 {offsets = [1, 0], sizes = [15, 128], strides = [1, 1]} : vector<16x128xf32> to vector<15x128xf32>
    %43 = tpu.concatenate %42, %2 in 0 : vector<15x128xf32>, vector<1x128xf32> -> vector<16x128xf32>
    %44 = tpu.concatenate %41, %38, %43 in 1 : vector<16x128xf32>, vector<16x128xf32>, vector<16x128xf32> -> vector<16x384xf32>
    %cst_19 = arith.constant dense<0.000000e+00> : vector<16x128xf32>
    %45 = tpu.matmul %44, %39, %cst_19 {dimension_numbers = #tpu.dot_dimension_numbers<[1], [0], [0], [1], [0, 0, 1, 1], [], []>} : vector<16x384xf32>, vector<384x128xf32>, vector<16x128xf32> -> vector<16x128xf32>
    %c0_20 = arith.constant 0 : index
    %c0_21 = arith.constant 0 : index
    %46 = vector.load %arg6[%c0_20, %c0_21] : memref<1x128xf32, #tpu.memory_space<vmem>>, vector<1x128xf32>
    %c0_22 = arith.constant 0 : index
    %c0_23 = arith.constant 0 : index
    %47 = vector.load %arg7[%c0_22, %c0_23] : memref<1x128xf32, #tpu.memory_space<vmem>>, vector<1x128xf32>
    %cst_24 = arith.constant dense<0.000000e+00> : vector<128xf32>
    %48 = vector.multi_reduction <add>, %45, %cst_24 [0] : vector<16x128xf32> to vector<128xf32>
    %49 = vector.shape_cast %48 : vector<128xf32> to vector<1x128xf32>
    %50 = arith.mulf %45, %45 : vector<16x128xf32>
    %cst_25 = arith.constant dense<0.000000e+00> : vector<128xf32>
    %51 = vector.multi_reduction <add>, %50, %cst_25 [0] : vector<16x128xf32> to vector<128xf32>
    %52 = vector.shape_cast %51 : vector<128xf32> to vector<1x128xf32>
    %53 = tpu.concatenate %49, %52 in 0 : vector<1x128xf32>, vector<1x128xf32> -> vector<2x128xf32>
    %cst_26 = arith.constant dense<0.000000e+00> : vector<2x128xf32>
    %54 = tpu.matmul %53, %1, %cst_26 {dimension_numbers = #tpu.dot_dimension_numbers<[1], [0], [0], [1], [0, 0, 1, 1], [], []>} : vector<2x128xf32>, vector<128x128xf32>, vector<2x128xf32> -> vector<2x128xf32>
    %55 = vector.extract_strided_slice %54 {offsets = [0, 0], sizes = [1, 128], strides = [1, 1]} : vector<2x128xf32> to vector<1x128xf32>
    %cst_27 = arith.constant 0.001953125 : f32
    %56 = vector.broadcast %cst_27 : f32 to vector<1x128xf32>
    %57 = arith.mulf %55, %56 : vector<1x128xf32>
    %58 = vector.extract_strided_slice %54 {offsets = [1, 0], sizes = [1, 128], strides = [1, 1]} : vector<2x128xf32> to vector<1x128xf32>
    %cst_28 = arith.constant 0.001953125 : f32
    %59 = vector.broadcast %cst_28 : f32 to vector<1x128xf32>
    %60 = arith.mulf %58, %59 : vector<1x128xf32>
    %61 = arith.mulf %57, %57 : vector<1x128xf32>
    %62 = arith.subf %60, %61 : vector<1x128xf32>
    %63 = vector.broadcast %57 : vector<1x128xf32> to vector<16x128xf32>
    %64 = arith.subf %45, %63 : vector<16x128xf32>
    %cst_29 = arith.constant 9.99999974E-6 : f32
    %65 = vector.broadcast %cst_29 : f32 to vector<1x128xf32>
    %66 = arith.addf %62, %65 : vector<1x128xf32>
    %67 = math.rsqrt %66 : vector<1x128xf32>
    %68 = arith.mulf %67, %46 : vector<1x128xf32>
    %69 = vector.broadcast %68 : vector<1x128xf32> to vector<16x128xf32>
    %70 = arith.mulf %64, %69 : vector<16x128xf32>
    %71 = vector.broadcast %47 : vector<1x128xf32> to vector<16x128xf32>
    %72 = arith.addf %70, %71 : vector<16x128xf32>
    %73 = arith.addf %72, %0 : vector<16x128xf32>
    %cst_30 = arith.constant 0.000000e+00 : f32
    %74 = vector.broadcast %cst_30 : f32 to vector<16x128xf32>
    %75 = arith.maximumf %73, %74 : vector<16x128xf32>
    %c0_31 = arith.constant 0 : index
    %c0_32 = arith.constant 0 : index
    %76 = vector.load %arg8[%c0_31, %c0_32] : memref<16x128xf32, #tpu.memory_space<vmem>>, vector<16x128xf32>
    tpu.vector_store %arg8[%c0_31, %c0_32], %75 {strides = array<i32>} : memref<16x128xf32, #tpu.memory_space<vmem>>, vector<16x128xf32>,
    return
  }
}

</mosaic_0001>

<llo_original>
// kernel: resblock_pallas.1
$region0: #{resblock_pallas.1}
  #allocation0 [shape = 'u32[]', space=smem, size = 0x4, offset = 0x4, fixed_abs, tag = 'smem constant byte address 0x4 - core index']
  #allocation1 [shape = 'u32[144,128]{1,0:T(1,128)}', space=vmem, size = 0x12000, scoped, tag = 'internal scratch']
  %s0 = inlined_call_operand.vmem [shape: f32[16,128], index: 0, kind: input, shape index: {}]
  %s1 = inlined_call_operand.vmem [shape: f32[384,128], index: 1, kind: input, shape index: {}]
  %s2 = inlined_call_operand.hbm [shape: f32[384,128], index: 2, kind: input, shape index: {}]
  %s3 = inlined_call_operand.hbm [shape: f32[128,128], index: 3, kind: input, shape index: {}]
  %s4 = inlined_call_operand.vmem [shape: f32[1,128], index: 4, kind: input, shape index: {}]
  %s5 = inlined_call_operand.vmem [shape: f32[1,128], index: 5, kind: input, shape index: {}]
  %s6 = inlined_call_operand.vmem [shape: f32[1,128], index: 6, kind: input, shape index: {}]
  %s7 = inlined_call_operand.vmem [shape: f32[1,128], index: 7, kind: input, shape index: {}]
  %s8 = inlined_call_operand.vmem [shape: f32[16,128], index: 8, kind: output, shape index: {}]
  %s9 = sld [smem:[#allocation0]]
  $region50: #{resblock_pallas.1} parent=0
    _
  %s11 = ssub.s32 1, %s9
  %s12 = scalar_select 0, %s11, %s9
  $region1: #{resblock_pallas.1} parent=0
    #allocation2 [shape = 'u8[196608]{0}', space=vmem, size = 0x30000, scoped, tag = 'input window, operand 2, single buffered']
    #allocation3 [shape = 's32[1]{0}', space=sflag, size = 0x4, scoped, tag = 'scoped memory for resblock_pallas.1']
    #allocation4 [shape = 'u8[65536]{0}', space=vmem, size = 0x10000, scoped, tag = 'input window, operand 3, single buffered']
    #allocation5 [shape = 's32[1]{0}', space=sflag, size = 0x4, scoped, tag = 'scoped memory for resblock_pallas.1']
    %13 = vsyncpa [#allocation3], 0
    %14 = vsyncpa [#allocation5], 0
    // Predicated region
    $region2: #{resblock_pallas.1} parent=1 // pred_check
      _
    $region3: #{resblock_pallas.1} parent=1 // pred_check_branch
      %16 = sbr.rel (0) target = $region5
    $region4: #{resblock_pallas.1} parent=1 // pred_region
      _
    $region5: #{resblock_pallas.1} parent=1 // pred_fallthru
      _
    // Predicated region
    $region6: #{resblock_pallas.1} parent=1 // pred_check
      _
    $region7: #{resblock_pallas.1} parent=1 // pred_check_branch
      %18 = sbr.rel (0) target = $region9
    $region8: #{resblock_pallas.1} parent=1 // pred_region
      _
    $region9: #{resblock_pallas.1} parent=1 // pred_fallthru
      _
    // Predicated region
    $region10: #{resblock_pallas.1} parent=1 // pred_check
      _
    $region11: #{resblock_pallas.1} parent=1 // pred_check_branch
      %20 = sbr.rel (0) target = $region13
    $region12: #{resblock_pallas.1} parent=1 // pred_region
      %s22 = ssub.s32 6144, 6144
      %23 = vsyncadd [#allocation3], %s22
      %s24 = sshll.u32 [#allocation2], 4
      %s25 = int_to_ptr.vmem [resolvable:$true] %s24
      %30 = dma.hbm_to_vmem [thread:$0]  %s2, 6144, %s25, [#allocation3], 128, 128, 8
    $region13: #{resblock_pallas.1} parent=1 // pred_fallthru
      _
    // Predicated region
    $region14: #{resblock_pallas.1} parent=1 // pred_check
      _
    $region15: #{resblock_pallas.1} parent=1 // pred_check_branch
      %32 = sbr.rel (0) target = $region17
    $region16: #{resblock_pallas.1} parent=1 // pred_region
      %s34 = ssub.s32 2048, 2048
      %35 = vsyncadd [#allocation5], %s34
      %s36 = sshll.u32 [#allocation4], 4
      %s37 = int_to_ptr.vmem [resolvable:$true] %s36
      %42 = dma.hbm_to_vmem [thread:$0]  %s3, 2048, %s37, [#allocation5], 128, 128, 8
    $region17: #{resblock_pallas.1} parent=1 // pred_fallthru
      _
    // Predicated region
    $region18: #{resblock_pallas.1} parent=1 // pred_check
      _
    $region19: #{resblock_pallas.1} parent=1 // pred_check_branch
      %44 = sbr.rel (0) target = $region21
    $region20: #{resblock_pallas.1} parent=1 // pred_region
      _
    $region21: #{resblock_pallas.1} parent=1 // pred_fallthru
      _
    // Predicated region
    $region22: #{resblock_pallas.1} parent=1 // pred_check
      _
    $region23: #{resblock_pallas.1} parent=1 // pred_check_branch
      %46 = sbr.rel (0) target = $region25
    $region24: #{resblock_pallas.1} parent=1 // pred_region
      _
    $region25: #{resblock_pallas.1} parent=1 // pred_fallthru
      _
    // Predicated region
    $region26: #{resblock_pallas.1} parent=1 // pred_check
      _
    $region27: #{resblock_pallas.1} parent=1 // pred_check_branch
      %48 = sbr.rel (0) target = $region29
    $region28: #{resblock_pallas.1} parent=1 // pred_region
      _
    $region29: #{resblock_pallas.1} parent=1 // pred_fallthru
      _
    // Predicated region
    $region30: #{resblock_pallas.1} parent=1 // pred_check
      _
    $region31: #{resblock_pallas.1} parent=1 // pred_check_branch
      %50 = sbr.rel (0) target = $region33
    $region32: #{resblock_pallas.1} parent=1 // pred_region
      _
    $region33: #{resblock_pallas.1} parent=1 // pred_fallthru
      _
    // Predicated region
    $region34: #{resblock_pallas.1} parent=1 // pred_check
      _
    $region35: #{resblock_pallas.1} parent=1 // pred_check_branch
      %52 = sbr.rel (0) target = $region37
    $region36: #{resblock_pallas.1} parent=1 // pred_region
      %53 = dma.done [#allocation3], 6144
    $region37: #{resblock_pallas.1} parent=1 // pred_fallthru
      _
    // Predicated region
    $region38: #{resblock_pallas.1} parent=1 // pred_check
      _
    $region39: #{resblock_pallas.1} parent=1 // pred_check_branch
      %55 = sbr.rel (0) target = $region41
    $region40: #{resblock_pallas.1} parent=1 // pred_region
      %56 = dma.done [#allocation5], 2048
    $region41: #{resblock_pallas.1} parent=1 // pred_fallthru
      _
    %v57 = vld [vmem:[%s0] sm:$0xff]
    %v58 = vld [vmem:[%s0 + $0x8] sm:$0xff]
    %v59 = vld [vmem:[#allocation4] sm:$0xff]
    %v60 = vld [vmem:[#allocation4 + $0x8] sm:$0xff]
    %v61 = vld [vmem:[#allocation4 + $0x10] sm:$0xff]
    %v62 = vld [vmem:[#allocation4 + $0x18] sm:$0xff]
    %v63 = vld [vmem:[#allocation4 + $0x20] sm:$0xff]
    %v64 = vld [vmem:[#allocation4 + $0x28] sm:$0xff]
    %v65 = vld [vmem:[#allocation4 + $0x30] sm:$0xff]
    %v66 = vld [vmem:[#allocation4 + $0x38] sm:$0xff]
    %v67 = vld [vmem:[#allocation4 + $0x40] sm:$0xff]
    %v68 = vld [vmem:[#allocation4 + $0x48] sm:$0xff]
    %v69 = vld [vmem:[#allocation4 + $0x50] sm:$0xff]
    %v70 = vld [vmem:[#allocation4 + $0x58] sm:$0xff]
    %v71 = vld [vmem:[#allocation4 + $0x60] sm:$0xff]
    %v72 = vld [vmem:[#allocation4 + $0x68] sm:$0xff]
    %v73 = vld [vmem:[#allocation4 + $0x70] sm:$0xff]
    %v74 = vld [vmem:[#allocation4 + $0x78] sm:$0xff]
    %v75 = vld [vmem:[%s1] sm:$0xff]
    %v76 = vld [vmem:[%s1 + $0x8] sm:$0xff]
    %v77 = vld [vmem:[%s1 + $0x10] sm:$0xff]
    %v78 = vld [vmem:[%s1 + $0x18] sm:$0xff]
    %v79 = vld [vmem:[%s1 + $0x20] sm:$0xff]
    %v80 = vld [vmem:[%s1 + $0x28] sm:$0xff]
    %v81 = vld [vmem:[%s1 + $0x30] sm:$0xff]
    %v82 = vld [vmem:[%s1 + $0x38] sm:$0xff]
    %v83 = vld [vmem:[%s1 + $0x40] sm:$0xff]
    %v84 = vld [vmem:[%s1 + $0x48] sm:$0xff]
    %v85 = vld [vmem:[%s1 + $0x50] sm:$0xff]
    %v86 = vld [vmem:[%s1 + $0x58] sm:$0xff]
    %v87 = vld [vmem:[%s1 + $0x60] sm:$0xff]
    %v88 = vld [vmem:[%s1 + $0x68] sm:$0xff]
    %v89 = vld [vmem:[%s1 + $0x70] sm:$0xff]
    %v90 = vld [vmem:[%s1 + $0x78] sm:$0xff]
    %v91 = vld [vmem:[%s1 + $0x80] sm:$0xff]
    %v92 = vld [vmem:[%s1 + $0x88] sm:$0xff]
    %v93 = vld [vmem:[%s1 + $0x90] sm:$0xff]
    %v94 = vld [vmem:[%s1 + $0x98] sm:$0xff]
    %v95 = vld [vmem:[%s1 + $0xa0] sm:$0xff]
    %v96 = vld [vmem:[%s1 + $0xa8] sm:$0xff]
    %v97 = vld [vmem:[%s1 + $0xb0] sm:$0xff]
    %v98 = vld [vmem:[%s1 + $0xb8] sm:$0xff]
    %v99 = vld [vmem:[%s1 + $0xc0] sm:$0xff]
    %v100 = vld [vmem:[%s1 + $0xc8] sm:$0xff]
    %v101 = vld [vmem:[%s1 + $0xd0] sm:$0xff]
    %v102 = vld [vmem:[%s1 + $0xd8] sm:$0xff]
    %v103 = vld [vmem:[%s1 + $0xe0] sm:$0xff]
    %v104 = vld [vmem:[%s1 + $0xe8] sm:$0xff]
    %v105 = vld [vmem:[%s1 + $0xf0] sm:$0xff]
    %v106 = vld [vmem:[%s1 + $0xf8] sm:$0xff]
    %v107 = vld [vmem:[%s1 + $0x100] sm:$0xff]
    %v108 = vld [vmem:[%s1 + $0x108] sm:$0xff]
    %v109 = vld [vmem:[%s1 + $0x110] sm:$0xff]
    %v110 = vld [vmem:[%s1 + $0x118] sm:$0xff]
    %v111 = vld [vmem:[%s1 + $0x120] sm:$0xff]
    %v112 = vld [vmem:[%s1 + $0x128] sm:$0xff]
    %v113 = vld [vmem:[%s1 + $0x130] sm:$0xff]
    %v114 = vld [vmem:[%s1 + $0x138] sm:$0xff]
    %v115 = vld [vmem:[%s1 + $0x140] sm:$0xff]
    %v116 = vld [vmem:[%s1 + $0x148] sm:$0xff]
    %v117 = vld [vmem:[%s1 + $0x150] sm:$0xff]
    %v118 = vld [vmem:[%s1 + $0x158] sm:$0xff]
    %v119 = vld [vmem:[%s1 + $0x160] sm:$0xff]
    %v120 = vld [vmem:[%s1 + $0x168] sm:$0xff]
    %v121 = vld [vmem:[%s1 + $0x170] sm:$0xff]
    %v122 = vld [vmem:[%s1 + $0x178] sm:$0xff]
    %vm125 = vcmask 1040384
    %v126 = vrot.slane %v57, 7
    %v127 = vrot.slane %v58, 7
    %v128 = vsel %vm125, %v126, %v127
    %v131 = vsel %vm125, 0.0, %v126
    %vm132 = vcmask 1046528
    %v133 = vrot.slane %v57, 1
    %v134 = vrot.slane %v58, 1
    %v135 = vsel %vm132, %v133, %v134
    %v138 = vsel %vm132, %v134, 0.0
    %139 = vmatprep.subr.mxu0 0.0
    %140 = vmatpush1.msra.mxu0 %v90
    %141 = vmatprep.subr.mxu0 0.0
    %142 = vmatpush1.msra.mxu0 %v89
    %143 = vmatprep.subr.mxu0 0.0
    %144 = vmatpush1.msra.mxu0 %v88
    %145 = vmatprep.subr.mxu0 0.0
    %146 = vmatpush1.msra.mxu0 %v87
    %147 = vmatprep.subr.mxu0 0.0
    %148 = vmatpush1.msra.mxu0 %v86
    %149 = vmatprep.subr.mxu0 0.0
    %150 = vmatpush1.msra.mxu0 %v85
    %151 = vmatprep.subr.mxu0 0.0
    %152 = vmatpush1.msra.mxu0 %v84
    %153 = vmatprep.subr.mxu0 0.0
    %154 = vmatpush1.msra.mxu0 %v83
    %155 = vmatprep.subr.mxu0 0.0
    %156 = vmatpush1.msra.mxu0 %v82
    %157 = vmatprep.subr.mxu0 0.0
    %158 = vmatpush1.msra.mxu0 %v81
    %159 = vmatprep.subr.mxu0 0.0
    %160 = vmatpush1.msra.mxu0 %v80
    %161 = vmatprep.subr.mxu0 0.0
    %162 = vmatpush1.msra.mxu0 %v79
    %163 = vmatprep.subr.mxu0 0.0
    %164 = vmatpush1.msra.mxu0 %v78
    %165 = vmatprep.subr.mxu0 0.0
    %166 = vmatpush1.msra.mxu0 %v77
    %167 = vmatprep.subr.mxu0 0.0
    %168 = vmatpush1.msra.mxu0 %v76
    %169 = vmatprep.subr.mxu0 0.0
    %170 = vmatpush1.msra.mxu0 %v75
    %171 = vmatprep.subr.mxu0 0.0
    %172 = vmatpush2.msra.mxu0 %v106
    %173 = vmatprep.subr.mxu0 0.0
    %174 = vmatpush2.msra.mxu0 %v105
    %175 = vmatprep.subr.mxu0 0.0
    %176 = vmatpush2.msra.mxu0 %v104
    %177 = vmatprep.subr.mxu0 0.0
    %178 = vmatpush2.msra.mxu0 %v103
    %179 = vmatprep.subr.mxu0 0.0
    %180 = vmatpush2.msra.mxu0 %v102
    %181 = vmatprep.subr.mxu0 0.0
    %182 = vmatpush2.msra.mxu0 %v101
    %183 = vmatprep.subr.mxu0 0.0
    %184 = vmatpush2.msra.mxu0 %v100
    %185 = vmatprep.subr.mxu0 0.0
    %186 = vmatpush2.msra.mxu0 %v99
    %187 = vmatprep.subr.mxu0 0.0
    %188 = vmatpush2.msra.mxu0 %v98
    %189 = vmatprep.subr.mxu0 0.0
    %190 = vmatpush2.msra.mxu0 %v97
    %191 = vmatprep.subr.mxu0 0.0
    %192 = vmatpush2.msra.mxu0 %v96
    %193 = vmatprep.subr.mxu0 0.0
    %194 = vmatpush2.msra.mxu0 %v95
    %195 = vmatprep.subr.mxu0 0.0
    %196 = vmatpush2.msra.mxu0 %v94
    %197 = vmatprep.subr.mxu0 0.0
    %198 = vmatpush2.msra.mxu0 %v93
    %199 = vmatprep.subr.mxu0 0.0
    %200 = vmatpush2.msra.mxu0 %v92
    %201 = vmatprep.subr.mxu0 0.0
    %202 = vmatpush2.msra.mxu0 %v91
    %203 = vmatprep.mubr.f32.mxu0 %v57
    %204 = vmatmul.mubr.f32.gmra.mxu0 %v131
    %v205 = vpop.f32.mrf.mxu0
    %v206 = vadd.f32 0.0, %v205
    %v207 = vpop.f32.mrf.mxu0
    %208 = vmatprep.mubr.f32.mxu0 %v58
    %209 = vmatmul.mubr.f32.gmra.mxu0 %v128
    %v210 = vpop.f32.mrf.mxu0
    %v211 = vadd.f32 0.0, %v210
    %v212 = vpop.f32.mrf.mxu0
    %213 = vdwg.mxu0
    %214 = vmatprep.subr.mxu0 0.0
    %215 = vmatpush1.msra.mxu0 %v122
    %216 = vmatprep.subr.mxu0 0.0
    %217 = vmatpush1.msra.mxu0 %v121
    %218 = vmatprep.subr.mxu0 0.0
    %219 = vmatpush1.msra.mxu0 %v120
    %220 = vmatprep.subr.mxu0 0.0
    %221 = vmatpush1.msra.mxu0 %v119
    %222 = vmatprep.subr.mxu0 0.0
    %223 = vmatpush1.msra.mxu0 %v118
    %224 = vmatprep.subr.mxu0 0.0
    %225 = vmatpush1.msra.mxu0 %v117
    %226 = vmatprep.subr.mxu0 0.0
    %227 = vmatpush1.msra.mxu0 %v116
    %228 = vmatprep.subr.mxu0 0.0
    %229 = vmatpush1.msra.mxu0 %v115
    %230 = vmatprep.subr.mxu0 0.0
    %231 = vmatpush1.msra.mxu0 %v114
    %232 = vmatprep.subr.mxu0 0.0
    %233 = vmatpush1.msra.mxu0 %v113
    %234 = vmatprep.subr.mxu0 0.0
    %235 = vmatpush1.msra.mxu0 %v112
    %236 = vmatprep.subr.mxu0 0.0
    %237 = vmatpush1.msra.mxu0 %v111
    %238 = vmatprep.subr.mxu0 0.0
    %239 = vmatpush1.msra.mxu0 %v110
    %240 = vmatprep.subr.mxu0 0.0
    %241 = vmatpush1.msra.mxu0 %v109
    %242 = vmatprep.subr.mxu0 0.0
    %243 = vmatpush1.msra.mxu0 %v108
    %244 = vmatprep.subr.mxu0 0.0
    %245 = vmatpush1.msra.mxu0 %v107
    %246 = vmatprep.subr.mxu0 0.0
    %247 = vmatpush2.msra.mxu0 0.0
    %248 = vmatprep.subr.mxu0 0.0
    %249 = vmatpush2.msra.mxu0 0.0
    %250 = vmatprep.subr.mxu0 0.0
    %251 = vmatpush2.msra.mxu0 0.0
    %252 = vmatprep.subr.mxu0 0.0
    %253 = vmatpush2.msra.mxu0 0.0
    %254 = vmatprep.subr.mxu0 0.0
    %255 = vmatpush2.msra.mxu0 0.0
    %256 = vmatprep.subr.mxu0 0.0
    %257 = vmatpush2.msra.mxu0 0.0
    %258 = vmatprep.subr.mxu0 0.0
    %259 = vmatpush2.msra.mxu0 0.0
    %260 = vmatprep.subr.mxu0 0.0
    %261 = vmatpush2.msra.mxu0 0.0
    %262 = vmatprep.subr.mxu0 0.0
    %263 = vmatpush2.msra.mxu0 0.0
    %264 = vmatprep.subr.mxu0 0.0
    %265 = vmatpush2.msra.mxu0 0.0
    %266 = vmatprep.subr.mxu0 0.0
    %267 = vmatpush2.msra.mxu0 0.0
    %268 = vmatprep.subr.mxu0 0.0
    %269 = vmatpush2.msra.mxu0 0.0
    %270 = vmatprep.subr.mxu0 0.0
    %271 = vmatpush2.msra.mxu0 0.0
    %272 = vmatprep.subr.mxu0 0.0
    %273 = vmatpush2.msra.mxu0 0.0
    %274 = vmatprep.subr.mxu0 0.0
    %275 = vmatpush2.msra.mxu0 0.0
    %276 = vmatprep.subr.mxu0 0.0
    %277 = vmatpush2.msra.mxu0 0.0
    %278 = vmatprep.mubr.f32.mxu0 0.0
    %279 = vmatmul.mubr.f32.gmra.mxu0 %v135
    %v280 = vpop.f32.mrf.mxu0
    %v281 = vadd.f32 %v206, %v280
    %v282 = vpop.f32.mrf.mxu0
    %283 = vmatprep.mubr.f32.mxu0 0.0
    %284 = vmatmul.mubr.f32.gmra.mxu0 %v138
    %v285 = vpop.f32.mrf.mxu0
    %v286 = vadd.f32 %v211, %v285
    %v287 = vpop.f32.mrf.mxu0
    %288 = vdwg.mxu0
    %v289 = vld [vmem:[%s4] sm:$0x1]
    %v290 = vld [vmem:[%s5] sm:$0x1]
    %v291 = vadd.f32 %v281, %v286
    %v292 = vrot.slane %v291, 4
    %v293 = vadd.f32 %v291, %v292
    %v294 = vrot.slane %v293, 2
    %v295 = vadd.f32 %v293, %v294
    %v296 = vrot.slane %v295, 1
    %v297 = vadd.f32 %v295, %v296
    %v298 = vmul.f32 %v281, %v281
    %v299 = vmul.f32 %v286, %v286
    %v300 = vadd.f32 %v298, %v299
    %v301 = vrot.slane %v300, 4
    %v302 = vadd.f32 %v300, %v301
    %v303 = vrot.slane %v302, 2
    %v304 = vadd.f32 %v302, %v303
    %v305 = vrot.slane %v304, 1
    %v306 = vadd.f32 %v304, %v305
    %v307 = vsel %vm125, %v297, %v306
    %308 = vmatprep.subr.mxu0 0.0
    %309 = vmatpush1.msra.mxu0 %v74
    %310 = vmatprep.subr.mxu0 0.0
    %311 = vmatpush1.msra.mxu0 %v73
    %312 = vmatprep.subr.mxu0 0.0
    %313 = vmatpush1.msra.mxu0 %v72
    %314 = vmatprep.subr.mxu0 0.0
    %315 = vmatpush1.msra.mxu0 %v71
    %316 = vmatprep.subr.mxu0 0.0
    %317 = vmatpush1.msra.mxu0 %v70
    %318 = vmatprep.subr.mxu0 0.0
    %319 = vmatpush1.msra.mxu0 %v69
    %320 = vmatprep.subr.mxu0 0.0
    %321 = vmatpush1.msra.mxu0 %v68
    %322 = vmatprep.subr.mxu0 0.0
    %323 = vmatpush1.msra.mxu0 %v67
    %324 = vmatprep.subr.mxu0 0.0
    %325 = vmatpush1.msra.mxu0 %v66
    %326 = vmatprep.subr.mxu0 0.0
    %327 = vmatpush1.msra.mxu0 %v65
    %328 = vmatprep.subr.mxu0 0.0
    %329 = vmatpush1.msra.mxu0 %v64
    %330 = vmatprep.subr.mxu0 0.0
    %331 = vmatpush1.msra.mxu0 %v63
    %332 = vmatprep.subr.mxu0 0.0
    %333 = vmatpush1.msra.mxu0 %v62
    %334 = vmatprep.subr.mxu0 0.0
    %335 = vmatpush1.msra.mxu0 %v61
    %336 = vmatprep.subr.mxu0 0.0
    %337 = vmatpush1.msra.mxu0 %v60
    %338 = vmatprep.subr.mxu0 0.0
    %339 = vmatpush1.msra.mxu0 %v59
    %340 = vmatprep.subr.mxu0 0.0
    %341 = vmatpush2.msra.mxu0 0.0
    %342 = vmatprep.subr.mxu0 0.0
    %343 = vmatpush2.msra.mxu0 0.0
    %344 = vmatprep.subr.mxu0 0.0
    %345 = vmatpush2.msra.mxu0 0.0
    %346 = vmatprep.subr.mxu0 0.0
    %347 = vmatpush2.msra.mxu0 0.0
    %348 = vmatprep.subr.mxu0 0.0
    %349 = vmatpush2.msra.mxu0 0.0
    %350 = vmatprep.subr.mxu0 0.0
    %351 = vmatpush2.msra.mxu0 0.0
    %352 = vmatprep.subr.mxu0 0.0
    %353 = vmatpush2.msra.mxu0 0.0
    %354 = vmatprep.subr.mxu0 0.0
    %355 = vmatpush2.msra.mxu0 0.0
    %356 = vmatprep.subr.mxu0 0.0
    %357 = vmatpush2.msra.mxu0 0.0
    %358 = vmatprep.subr.mxu0 0.0
    %359 = vmatpush2.msra.mxu0 0.0
    %360 = vmatprep.subr.mxu0 0.0
    %361 = vmatpush2.msra.mxu0 0.0
    %362 = vmatprep.subr.mxu0 0.0
    %363 = vmatpush2.msra.mxu0 0.0
    %364 = vmatprep.subr.mxu0 0.0
    %365 = vmatpush2.msra.mxu0 0.0
    %366 = vmatprep.subr.mxu0 0.0
    %367 = vmatpush2.msra.mxu0 0.0
    %368 = vmatprep.subr.mxu0 0.0
    %369 = vmatpush2.msra.mxu0 0.0
    %370 = vmatprep.subr.mxu0 0.0
    %371 = vmatpush2.msra.mxu0 0.0
    %372 = vmatprep.mubr.f32.mxu0 0.0
    %373 = vmatmul.mubr.f32.gmra.mxu0 %v307
    %v374 = vpop.f32.mrf.mxu0
    %v375 = vadd.f32 0.0, %v374
    %v376 = vpop.f32.mrf.mxu0
    %377 = vdwg.mxu0
    %v378 = vmul.f32 %v375, 0.001953125
    %v379 = vmul.f32 %v378, %v378
    %v381 = vrot.slane %v379, 7
    %v383 = vsub.f32 %v378, %v381
    %v384 = vlaneseq
    %v385 = vshrl.u32 %v384, 7
    %v386 = vsub.s32 0, %v385
    %v387 = vrot.slane %v378, %v386
    %v388 = vsub.f32 %v281, %v387
    %v389 = vsub.f32 %v286, %v387
    %v390 = vadd.f32 %v383, 1e-05
    %v391 = vrsqrt.pop %v390
    %v393 = vlaneseq
    %v394 = vshrl.u32 %v393, 7
    %v395 = vsub.s32 0, %v394
    %v396 = vrot.slane %v289, %v395
    %v398 = vmul.f32 %v391, %v396
    %v399 = vlaneseq
    %v400 = vshrl.u32 %v399, 7
    %v401 = vsub.s32 1, %v400
    %v402 = vrot.slane %v398, %v401
    %v403 = vmul.f32 %v388, %v402
    %v404 = vmul.f32 %v389, %v402
    %v406 = vlaneseq
    %v407 = vshrl.u32 %v406, 7
    %v408 = vsub.s32 0, %v407
    %v409 = vrot.slane %v290, %v408
    %v411 = vadd.f32 %v403, %v409
    %v412 = vadd.f32 %v404, %v409
    %v413 = vmax.f32 %v411, 0.0
    %v414 = vmax.f32 %v412, 0.0
    %v415 = vld [vmem:[#allocation2] sm:$0xff]
    %v416 = vld [vmem:[#allocation2 + $0x8] sm:$0xff]
    %v417 = vld [vmem:[#allocation2 + $0x10] sm:$0xff]
    %v418 = vld [vmem:[#allocation2 + $0x18] sm:$0xff]
    %v419 = vld [vmem:[#allocation2 + $0x20] sm:$0xff]
    %v420 = vld [vmem:[#allocation2 + $0x28] sm:$0xff]
    %v421 = vld [vmem:[#allocation2 + $0x30] sm:$0xff]
    %v422 = vld [vmem:[#allocation2 + $0x38] sm:$0xff]
    %v423 = vld [vmem:[#allocation2 + $0x40] sm:$0xff]
    %v424 = vld [vmem:[#allocation2 + $0x48] sm:$0xff]
    %v425 = vld [vmem:[#allocation2 + $0x50] sm:$0xff]
    %v426 = vld [vmem:[#allocation2 + $0x58] sm:$0xff]
    %v427 = vld [vmem:[#allocation2 + $0x60] sm:$0xff]
    %v428 = vld [vmem:[#allocation2 + $0x68] sm:$0xff]
    %v429 = vld [vmem:[#allocation2 + $0x70] sm:$0xff]
    %v430 = vld [vmem:[#allocation2 + $0x78] sm:$0xff]
    %v431 = vld [vmem:[#allocation2 + $0x80] sm:$0xff]
    %v432 = vld [vmem:[#allocation2 + $0x88] sm:$0xff]
    %v433 = vld [vmem:[#allocation2 + $0x90] sm:$0xff]
    %v434 = vld [vmem:[#allocation2 + $0x98] sm:$0xff]
    %v435 = vld [vmem:[#allocation2 + $0xa0] sm:$0xff]
    %v436 = vld [vmem:[#allocation2 + $0xa8] sm:$0xff]
    %v437 = vld [vmem:[#allocation2 + $0xb0] sm:$0xff]
    %v438 = vld [vmem:[#allocation2 + $0xb8] sm:$0xff]
    %v439 = vld [vmem:[#allocation2 + $0xc0] sm:$0xff]
    %v440 = vld [vmem:[#allocation2 + $0xc8] sm:$0xff]
    %v441 = vld [vmem:[#allocation2 + $0xd0] sm:$0xff]
    %v442 = vld [vmem:[#allocation2 + $0xd8] sm:$0xff]
    %v443 = vld [vmem:[#allocation2 + $0xe0] sm:$0xff]
    %v444 = vld [vmem:[#allocation2 + $0xe8] sm:$0xff]
    %v445 = vld [vmem:[#allocation2 + $0xf0] sm:$0xff]
    %v446 = vld [vmem:[#allocation2 + $0xf8] sm:$0xff]
    %v447 = vld [vmem:[#allocation2 + $0x100] sm:$0xff]
    %v448 = vld [vmem:[#allocation2 + $0x108] sm:$0xff]
    %v449 = vld [vmem:[#allocation2 + $0x110] sm:$0xff]
    %v450 = vld [vmem:[#allocation2 + $0x118] sm:$0xff]
    %v451 = vld [vmem:[#allocation2 + $0x120] sm:$0xff]
    %v452 = vld [vmem:[#allocation2 + $0x128] sm:$0xff]
    %v453 = vld [vmem:[#allocation2 + $0x130] sm:$0xff]
    %v454 = vld [vmem:[#allocation2 + $0x138] sm:$0xff]
    %v455 = vld [vmem:[#allocation2 + $0x140] sm:$0xff]
    %v456 = vld [vmem:[#allocation2 + $0x148] sm:$0xff]
    %v457 = vld [vmem:[#allocation2 + $0x150] sm:$0xff]
    %v458 = vld [vmem:[#allocation2 + $0x158] sm:$0xff]
    %v459 = vld [vmem:[#allocation2 + $0x160] sm:$0xff]
    %v460 = vld [vmem:[#allocation2 + $0x168] sm:$0xff]
    %v461 = vld [vmem:[#allocation2 + $0x170] sm:$0xff]
    %v462 = vld [vmem:[#allocation2 + $0x178] sm:$0xff]
    %v465 = vrot.slane %v413, 7
    %v466 = vrot.slane %v414, 7
    %v467 = vsel %vm125, %v465, %v466
    %v470 = vsel %vm125, 0.0, %v465
    %v471 = vrot.slane %v413, 1
    %v472 = vrot.slane %v414, 1
    %v473 = vsel %vm132, %v471, %v472
    %v476 = vsel %vm132, %v472, 0.0
    %477 = vmatprep.subr.mxu0 0.0
    %478 = vmatpush1.msra.mxu0 %v430
    %479 = vmatprep.subr.mxu0 0.0
    %480 = vmatpush1.msra.mxu0 %v429
    %481 = vmatprep.subr.mxu0 0.0
    %482 = vmatpush1.msra.mxu0 %v428
    %483 = vmatprep.subr.mxu0 0.0
    %484 = vmatpush1.msra.mxu0 %v427
    %485 = vmatprep.subr.mxu0 0.0
    %486 = vmatpush1.msra.mxu0 %v426
    %487 = vmatprep.subr.mxu0 0.0
    %488 = vmatpush1.msra.mxu0 %v425
    %489 = vmatprep.subr.mxu0 0.0
    %490 = vmatpush1.msra.mxu0 %v424
    %491 = vmatprep.subr.mxu0 0.0
    %492 = vmatpush1.msra.mxu0 %v423
    %493 = vmatprep.subr.mxu0 0.0
    %494 = vmatpush1.msra.mxu0 %v422
    %495 = vmatprep.subr.mxu0 0.0
    %496 = vmatpush1.msra.mxu0 %v421
    %497 = vmatprep.subr.mxu0 0.0
    %498 = vmatpush1.msra.mxu0 %v420
    %499 = vmatprep.subr.mxu0 0.0
    %500 = vmatpush1.msra.mxu0 %v419
    %501 = vmatprep.subr.mxu0 0.0
    %502 = vmatpush1.msra.mxu0 %v418
    %503 = vmatprep.subr.mxu0 0.0
    %504 = vmatpush1.msra.mxu0 %v417
    %505 = vmatprep.subr.mxu0 0.0
    %506 = vmatpush1.msra.mxu0 %v416
    %507 = vmatprep.subr.mxu0 0.0
    %508 = vmatpush1.msra.mxu0 %v415
    %509 = vmatprep.subr.mxu0 0.0
    %510 = vmatpush2.msra.mxu0 %v446
    %511 = vmatprep.subr.mxu0 0.0
    %512 = vmatpush2.msra.mxu0 %v445
    %513 = vmatprep.subr.mxu0 0.0
    %514 = vmatpush2.msra.mxu0 %v444
    %515 = vmatprep.subr.mxu0 0.0
    %516 = vmatpush2.msra.mxu0 %v443
    %517 = vmatprep.subr.mxu0 0.0
    %518 = vmatpush2.msra.mxu0 %v442
    %519 = vmatprep.subr.mxu0 0.0
    %520 = vmatpush2.msra.mxu0 %v441
    %521 = vmatprep.subr.mxu0 0.0
    %522 = vmatpush2.msra.mxu0 %v440
    %523 = vmatprep.subr.mxu0 0.0
    %524 = vmatpush2.msra.mxu0 %v439
    %525 = vmatprep.subr.mxu0 0.0
    %526 = vmatpush2.msra.mxu0 %v438
    %527 = vmatprep.subr.mxu0 0.0
    %528 = vmatpush2.msra.mxu0 %v437
    %529 = vmatprep.subr.mxu0 0.0
    %530 = vmatpush2.msra.mxu0 %v436
    %531 = vmatprep.subr.mxu0 0.0
    %532 = vmatpush2.msra.mxu0 %v435
    %533 = vmatprep.subr.mxu0 0.0
    %534 = vmatpush2.msra.mxu0 %v434
    %535 = vmatprep.subr.mxu0 0.0
    %536 = vmatpush2.msra.mxu0 %v433
    %537 = vmatprep.subr.mxu0 0.0
    %538 = vmatpush2.msra.mxu0 %v432
    %539 = vmatprep.subr.mxu0 0.0
    %540 = vmatpush2.msra.mxu0 %v431
    %541 = vmatprep.mubr.f32.mxu0 %v413
    %542 = vmatmul.mubr.f32.gmra.mxu0 %v470
    %v543 = vpop.f32.mrf.mxu0
    %v544 = vadd.f32 0.0, %v543
    %v545 = vpop.f32.mrf.mxu0
    %546 = vmatprep.mubr.f32.mxu0 %v414
    %547 = vmatmul.mubr.f32.gmra.mxu0 %v467
    %v548 = vpop.f32.mrf.mxu0
    %v549 = vadd.f32 0.0, %v548
    %v550 = vpop.f32.mrf.mxu0
    %551 = vdwg.mxu0
    %552 = vmatprep.subr.mxu0 0.0
    %553 = vmatpush1.msra.mxu0 %v462
    %554 = vmatprep.subr.mxu0 0.0
    %555 = vmatpush1.msra.mxu0 %v461
    %556 = vmatprep.subr.mxu0 0.0
    %557 = vmatpush1.msra.mxu0 %v460
    %558 = vmatprep.subr.mxu0 0.0
    %559 = vmatpush1.msra.mxu0 %v459
    %560 = vmatprep.subr.mxu0 0.0
    %561 = vmatpush1.msra.mxu0 %v458
    %562 = vmatprep.subr.mxu0 0.0
    %563 = vmatpush1.msra.mxu0 %v457
    %564 = vmatprep.subr.mxu0 0.0
    %565 = vmatpush1.msra.mxu0 %v456
    %566 = vmatprep.subr.mxu0 0.0
    %567 = vmatpush1.msra.mxu0 %v455
    %568 = vmatprep.subr.mxu0 0.0
    %569 = vmatpush1.msra.mxu0 %v454
    %570 = vmatprep.subr.mxu0 0.0
    %571 = vmatpush1.msra.mxu0 %v453
    %572 = vmatprep.subr.mxu0 0.0
    %573 = vmatpush1.msra.mxu0 %v452
    %574 = vmatprep.subr.mxu0 0.0
    %575 = vmatpush1.msra.mxu0 %v451
    %576 = vmatprep.subr.mxu0 0.0
    %577 = vmatpush1.msra.mxu0 %v450
    %578 = vmatprep.subr.mxu0 0.0
    %579 = vmatpush1.msra.mxu0 %v449
    %580 = vmatprep.subr.mxu0 0.0
    %581 = vmatpush1.msra.mxu0 %v448
    %582 = vmatprep.subr.mxu0 0.0
    %583 = vmatpush1.msra.mxu0 %v447
    %584 = vmatprep.subr.mxu0 0.0
    %585 = vmatpush2.msra.mxu0 0.0
    %586 = vmatprep.subr.mxu0 0.0
    %587 = vmatpush2.msra.mxu0 0.0
    %588 = vmatprep.subr.mxu0 0.0
    %589 = vmatpush2.msra.mxu0 0.0
    %590 = vmatprep.subr.mxu0 0.0
    %591 = vmatpush2.msra.mxu0 0.0
    %592 = vmatprep.subr.mxu0 0.0
    %593 = vmatpush2.msra.mxu0 0.0
    %594 = vmatprep.subr.mxu0 0.0
    %595 = vmatpush2.msra.mxu0 0.0
    %596 = vmatprep.subr.mxu0 0.0
    %597 = vmatpush2.msra.mxu0 0.0
    %598 = vmatprep.subr.mxu0 0.0
    %599 = vmatpush2.msra.mxu0 0.0
    %600 = vmatprep.subr.mxu0 0.0
    %601 = vmatpush2.msra.mxu0 0.0
    %602 = vmatprep.subr.mxu0 0.0
    %603 = vmatpush2.msra.mxu0 0.0
    %604 = vmatprep.subr.mxu0 0.0
    %605 = vmatpush2.msra.mxu0 0.0
    %606 = vmatprep.subr.mxu0 0.0
    %607 = vmatpush2.msra.mxu0 0.0
    %608 = vmatprep.subr.mxu0 0.0
    %609 = vmatpush2.msra.mxu0 0.0
    %610 = vmatprep.subr.mxu0 0.0
    %611 = vmatpush2.msra.mxu0 0.0
    %612 = vmatprep.subr.mxu0 0.0
    %613 = vmatpush2.msra.mxu0 0.0
    %614 = vmatprep.subr.mxu0 0.0
    %615 = vmatpush2.msra.mxu0 0.0
    %616 = vmatprep.mubr.f32.mxu0 0.0
    %617 = vmatmul.mubr.f32.gmra.mxu0 %v473
    %v618 = vpop.f32.mrf.mxu0
    %v619 = vadd.f32 %v544, %v618
    %v620 = vpop.f32.mrf.mxu0
    %621 = vmatprep.mubr.f32.mxu0 0.0
    %622 = vmatmul.mubr.f32.gmra.mxu0 %v476
    %v623 = vpop.f32.mrf.mxu0
    %v624 = vadd.f32 %v549, %v623
    %v625 = vpop.f32.mrf.mxu0
    %626 = vdwg.mxu0
    %v627 = vld [vmem:[%s6] sm:$0x1]
    %v628 = vld [vmem:[%s7] sm:$0x1]
    %v629 = vadd.f32 %v619, %v624
    %v630 = vrot.slane %v629, 4
    %v631 = vadd.f32 %v629, %v630
    %v632 = vrot.slane %v631, 2
    %v633 = vadd.f32 %v631, %v632
    %v634 = vrot.slane %v633, 1
    %v635 = vadd.f32 %v633, %v634
    %v636 = vmul.f32 %v619, %v619
    %v637 = vmul.f32 %v624, %v624
    %v638 = vadd.f32 %v636, %v637
    %v639 = vrot.slane %v638, 4
    %v640 = vadd.f32 %v638, %v639
    %v641 = vrot.slane %v640, 2
    %v642 = vadd.f32 %v640, %v641
    %v643 = vrot.slane %v642, 1
    %v644 = vadd.f32 %v642, %v643
    %v645 = vsel %vm125, %v635, %v644
    %646 = vmatprep.subr.mxu0 0.0
    %647 = vmatpush1.msra.mxu0 %v74
    %648 = vmatprep.subr.mxu0 0.0
    %649 = vmatpush1.msra.mxu0 %v73
    %650 = vmatprep.subr.mxu0 0.0
    %651 = vmatpush1.msra.mxu0 %v72
    %652 = vmatprep.subr.mxu0 0.0
    %653 = vmatpush1.msra.mxu0 %v71
    %654 = vmatprep.subr.mxu0 0.0
    %655 = vmatpush1.msra.mxu0 %v70
    %656 = vmatprep.subr.mxu0 0.0
    %657 = vmatpush1.msra.mxu0 %v69
    %658 = vmatprep.subr.mxu0 0.0
    %659 = vmatpush1.msra.mxu0 %v68
    %660 = vmatprep.subr.mxu0 0.0
    %661 = vmatpush1.msra.mxu0 %v67
    %662 = vmatprep.subr.mxu0 0.0
    %663 = vmatpush1.msra.mxu0 %v66
    %664 = vmatprep.subr.mxu0 0.0
    %665 = vmatpush1.msra.mxu0 %v65
    %666 = vmatprep.subr.mxu0 0.0
    %667 = vmatpush1.msra.mxu0 %v64
    %668 = vmatprep.subr.mxu0 0.0
    %669 = vmatpush1.msra.mxu0 %v63
    %670 = vmatprep.subr.mxu0 0.0
    %671 = vmatpush1.msra.mxu0 %v62
    %672 = vmatprep.subr.mxu0 0.0
    %673 = vmatpush1.msra.mxu0 %v61
    %674 = vmatprep.subr.mxu0 0.0
    %675 = vmatpush1.msra.mxu0 %v60
    %676 = vmatprep.subr.mxu0 0.0
    %677 = vmatpush1.msra.mxu0 %v59
    %678 = vmatprep.subr.mxu0 0.0
    %679 = vmatpush2.msra.mxu0 0.0
    %680 = vmatprep.subr.mxu0 0.0
    %681 = vmatpush2.msra.mxu0 0.0
    %682 = vmatprep.subr.mxu0 0.0
    %683 = vmatpush2.msra.mxu0 0.0
    %684 = vmatprep.subr.mxu0 0.0
    %685 = vmatpush2.msra.mxu0 0.0
    %686 = vmatprep.subr.mxu0 0.0
    %687 = vmatpush2.msra.mxu0 0.0
    %688 = vmatprep.subr.mxu0 0.0
    %689 = vmatpush2.msra.mxu0 0.0
    %690 = vmatprep.subr.mxu0 0.0
    %691 = vmatpush2.msra.mxu0 0.0
    %692 = vmatprep.subr.mxu0 0.0
    %693 = vmatpush2.msra.mxu0 0.0
    %694 = vmatprep.subr.mxu0 0.0
    %695 = vmatpush2.msra.mxu0 0.0
    %696 = vmatprep.subr.mxu0 0.0
    %697 = vmatpush2.msra.mxu0 0.0
    %698 = vmatprep.subr.mxu0 0.0
    %699 = vmatpush2.msra.mxu0 0.0
    %700 = vmatprep.subr.mxu0 0.0
    %701 = vmatpush2.msra.mxu0 0.0
    %702 = vmatprep.subr.mxu0 0.0
    %703 = vmatpush2.msra.mxu0 0.0
    %704 = vmatprep.subr.mxu0 0.0
    %705 = vmatpush2.msra.mxu0 0.0
    %706 = vmatprep.subr.mxu0 0.0
    %707 = vmatpush2.msra.mxu0 0.0
    %708 = vmatprep.subr.mxu0 0.0
    %709 = vmatpush2.msra.mxu0 0.0
    %710 = vmatprep.mubr.f32.mxu0 0.0
    %711 = vmatmul.mubr.f32.gmra.mxu0 %v645
    %v712 = vpop.f32.mrf.mxu0
    %v713 = vadd.f32 0.0, %v712
    %v714 = vpop.f32.mrf.mxu0
    %715 = vdwg.mxu0
    %v716 = vmul.f32 %v713, 0.001953125
    %v717 = vmul.f32 %v716, %v716
    %v719 = vrot.slane %v717, 7
    %v721 = vsub.f32 %v716, %v719
    %v722 = vlaneseq
    %v723 = vshrl.u32 %v722, 7
    %v724 = vsub.s32 0, %v723
    %v725 = vrot.slane %v716, %v724
    %v726 = vsub.f32 %v619, %v725
    %v727 = vsub.f32 %v624, %v725
    %v728 = vadd.f32 %v721, 1e-05
    %v729 = vrsqrt.pop %v728
    %v731 = vlaneseq
    %v732 = vshrl.u32 %v731, 7
    %v733 = vsub.s32 0, %v732
    %v734 = vrot.slane %v627, %v733
    %v736 = vmul.f32 %v729, %v734
    %v737 = vlaneseq
    %v738 = vshrl.u32 %v737, 7
    %v739 = vsub.s32 1, %v738
    %v740 = vrot.slane %v736, %v739
    %v741 = vmul.f32 %v726, %v740
    %v742 = vmul.f32 %v727, %v740
    %v744 = vlaneseq
    %v745 = vshrl.u32 %v744, 7
    %v746 = vsub.s32 0, %v745
    %v747 = vrot.slane %v628, %v746
    %v749 = vadd.f32 %v741, %v747
    %v750 = vadd.f32 %v742, %v747
    %v751 = vadd.f32 %v749, %v57
    %v752 = vadd.f32 %v750, %v58
    %v753 = vmax.f32 %v751, 0.0
    %v754 = vmax.f32 %v752, 0.0
    %755 = vst [vmem:[%s8] sm:$0xff] %v753
    %756 = vst [vmem:[%s8 + $0x8] sm:$0xff] %v754
    // Predicated region
    $region42: #{resblock_pallas.1} parent=1 // pred_check
      _
    $region43: #{resblock_pallas.1} parent=1 // pred_check_branch
      %758 = sbr.rel (0) target = $region45
    $region44: #{resblock_pallas.1} parent=1 // pred_region
      _
    $region45: #{resblock_pallas.1} parent=1 // pred_fallthru
      _
    // Predicated region
    $region46: #{resblock_pallas.1} parent=1 // pred_check
      _
    $region47: #{resblock_pallas.1} parent=1 // pred_check_branch
      %760 = sbr.rel (0) target = $region49
    $region48: #{resblock_pallas.1} parent=1 // pred_region
      _
    $region49: #{resblock_pallas.1} parent=1 // pred_fallthru
      _
    %761 = vsyncpa [#allocation3], 1
    %762 = vsyncpa [#allocation5], 1

</llo_original>
